<compile_context>
chip_gen: v7x
topology: tpu7x:2x2x1
jax: 0.10.0
libtpu: 0.0.40
codegen_flags: <defaults>
</compile_context>

<pallas_src>
import functools

import jax
import jax.numpy as jnp
from jax.experimental import pallas as pl
from jax.experimental.pallas import tpu as pltpu


_LANES = 128
_CAP_TILE_BYTES = 4 * 1024 * 1024       # per-tile budget for the 2-D (aligned) path
_CAP_TILE_BYTES_1D = 1 * 1024 * 1024    # smaller budget for the ragged 1-D path
_MIN_SPLIT_BYTES = 256 * 1024           # only split small slabs if each half >= this
_VMEM_LIMIT_BYTES = 40 * 1024 * 1024    # fits v7x's 64 MiB physical VMEM with headroom


def _round_up(a: int, m: int) -> int:
    return -(-a // m) * m


def _round_down(a: int, m: int) -> int:
    return (a // m) * m


def _row_align(dtype) -> int:
    """Sublane-packing-aware row alignment: 8 (32-bit), 16 (16-bit), 32 (8-bit)."""
    packing = max(1, 4 // jnp.dtype(dtype).itemsize)
    return 8 * packing


def _num_tensorcores() -> int:
    """Best-effort TensorCore count (v7x has 2 per chip); fall back to 1."""
    try:
        info = pltpu.get_tpu_info()
    except Exception:
        return 1
    for attr in ("num_cores", "core_count", "num_tensorcores", "tensorcore_count"):
        n = getattr(info, attr, None)
        if n is None:
            continue
        try:
            n = int(n)
        except (TypeError, ValueError):
            continue
        if n > 0:
            return n
    return 1


def _apply_activation(x, activacion: str):
    """Elementwise activation matching the PyTorch dict-lookup semantics."""
    if activacion == "tanh":
        return jnp.tanh(x)
    elif activacion == "relu":
        return jnp.maximum(x, jnp.zeros_like(x))
    elif activacion == "sigmoid":
        return jax.nn.sigmoid(x)
    elif activacion == "softplus":
        # Matches F.softplus defaults (beta=1, threshold=20): linear above 20.
        twenty = jnp.asarray(20.0, dtype=x.dtype)
        safe = jnp.minimum(x, twenty)
        return jnp.where(x > twenty, x, jnp.log1p(jnp.exp(safe)))
    else:
        # Any other key (including the default '1') -> sin, per the module.
        return jnp.sin(x)


def _funact_kernel(x_ref, o_ref, *, activacion: str):
    x = x_ref[...]
    # Compute in f32 (clamped — never f64), cast back on store.  Free relative
    # to HBM traffic for this memory-bound op; better sin/softplus precision
    # for bf16, and v5e has no bf16 EUP/VPU anyway.
    # TODO(synk): integer inputs are computed in f32 and cast back to the input
    # dtype here, whereas torch would return a floating tensor.
    y = _apply_activation(x.astype(jnp.float32), activacion)
    o_ref[...] = y.astype(o_ref.dtype)


def _compiler_params():
    return pltpu.CompilerParams(
        dimension_semantics=("parallel",),
        vmem_limit_bytes=_VMEM_LIMIT_BYTES,
    )


def _run_2d(x2d: jax.Array, activacion: str) -> jax.Array:
    """Lane-dense (R, 128) slab, tiled over rows by a byte-based budget."""
    R, W = x2d.shape
    itemsize = jnp.dtype(x2d.dtype).itemsize
    row_align = _row_align(x2d.dtype)
    cap_rows = max(row_align, _round_down(_CAP_TILE_BYTES // (W * itemsize), row_align))

    if R <= cap_rows:
        half_bytes = (R // 2) * W * itemsize
        if (_num_tensorcores() >= 2 and R >= 2 * row_align
                and half_bytes >= _MIN_SPLIT_BYTES):
            # Multi-core chip and each half carries meaningful HBM traffic:
            # split into 2 aligned steps so both TensorCores get work.
            block_rows = _round_up(-(-R // 2), row_align)
        else:
            # Single block equal to the full array dims (always legal).
            block_rows = R
    else:
        block_rows = cap_rows

    grid = (pl.cdiv(R, block_rows),)
    kernel = functools.partial(_funact_kernel, activacion=activacion)

    return pl.pallas_call(
        kernel,
        out_shape=jax.ShapeDtypeStruct((R, W), x2d.dtype),
        grid_spec=pl.GridSpec(
            grid=grid,
            in_specs=[pl.BlockSpec((block_rows, W), lambda i: (i, 0))],
            out_specs=pl.BlockSpec((block_rows, W), lambda i: (i, 0)),
        ),
        compiler_params=_compiler_params(),
    )(x2d)


def _run_1d(flat: jax.Array, activacion: str) -> jax.Array:
    """Ragged path: 1-D grid over the raveled array; Pallas masks the tail."""
    (N,) = flat.shape
    itemsize = jnp.dtype(flat.dtype).itemsize
    row_align = _row_align(flat.dtype)
    quantum = row_align * _LANES
    cap_elems = max(quantum, _round_down(_CAP_TILE_BYTES_1D // itemsize, quantum))

    if N <= cap_elems:
        block = N                    # full-array block (legal for any N)
    else:
        block = cap_elems            # multiple of 128; final partial block masked

    grid = (pl.cdiv(N, block),)
    kernel = functools.partial(_funact_kernel, activacion=activacion)

    return pl.pallas_call(
        kernel,
        out_shape=jax.ShapeDtypeStruct((N,), flat.dtype),
        grid_spec=pl.GridSpec(
            grid=grid,
            in_specs=[pl.BlockSpec((block,), lambda i: (i,))],
            out_specs=pl.BlockSpec((block,), lambda i: (i,)),
        ),
        compiler_params=_compiler_params(),
    )(flat)


@functools.partial(jax.jit, static_argnames=("activacion",))
def _funact_jit(x: jax.Array, *, activacion: str) -> jax.Array:
    orig_shape = x.shape
    total = 1
    for d in orig_shape:
        total *= d
    if total == 0:
        return x

    flat = jnp.ravel(x)              # metadata-only under jit for contiguous x

    if total % _LANES == 0:
        # Aligned fast path: lane-dense (rows, 128) view — no pad, no unpad.
        y = _run_2d(flat.reshape(total // _LANES, _LANES), activacion)
    else:
        # Ragged path: 1-D grid directly over the flat array — no pad, no unpad.
        y = _run_1d(flat, activacion)

    return y.reshape(orig_shape)


def funact(x, activacion: str = "1") -> jax.Array:
    """Pallas TPU implementation of FunAct.forward.  Works on any shape."""
    return _funact_jit(jnp.asarray(x), activacion=str(activacion))


if __name__ == "__main__":
    key = jax.random.PRNGKey(0)
    # NCHW input, small shapes (B=2, C=4, H=W=16) — 2048 elements, 128-aligned.
    x = jax.random.normal(key, (2, 4, 16, 16), dtype=jnp.float32) * 3.0

    # Default activacion='1' -> falls back to sin (matches the PyTorch module).
    y = funact(x, activacion="1")
    jax.block_until_ready(y)

    ok = True

    # Sanity checks against plain-JAX references for all supported activations.
    refs = {
        "1": jnp.sin(x),
        "sin": jnp.sin(x),
        "tanh": jnp.tanh(x),
        "relu": jnp.maximum(x, 0.0),
        "sigmoid": jax.nn.sigmoid(x),
        "softplus": jnp.where(x > 20.0, x, jnp.log1p(jnp.exp(jnp.minimum(x, 20.0)))),
    }
    for name, ref in refs.items():
        out = jax.block_until_ready(funact(x, activacion=name))
        if out.shape != x.shape or out.dtype != x.dtype:
            ok = False
        elif not jnp.allclose(out, ref, atol=1e-5, rtol=1e-5):
            ok = False

    # Tiny ragged (non-128-multiple) shape -> single full-array 1-D block.
    x_r0 = jax.random.normal(jax.random.PRNGKey(1), (3, 5, 7), jnp.float32)
    out_r0 = jax.block_until_ready(funact(x_r0, "tanh"))
    ok = ok and bool(jnp.allclose(out_r0, jnp.tanh(x_r0), atol=1e-5, rtol=1e-5))

    # Larger ragged shape -> multi-block 1-D grid with a masked partial tail.
    x_r1 = jax.random.normal(jax.random.PRNGKey(2), (37, 65, 125), jnp.float32)
    out_r1 = jax.block_until_ready(funact(x_r1, "sigmoid"))
    ok = ok and bool(jnp.allclose(out_r1, jax.nn.sigmoid(x_r1), atol=1e-5, rtol=1e-5))

    # Aligned shape larger than one tile -> multi-block 2-D grid, masked last block.
    x_big = jax.random.normal(jax.random.PRNGKey(3), (513, 4096), jnp.float32)
    out_big = jax.block_until_ready(funact(x_big, "relu"))
    ok = ok and bool(jnp.allclose(out_big, jnp.maximum(x_big, 0.0), atol=1e-5, rtol=1e-5))

    # bf16 input: computed in f32 inside the kernel, stored back as bf16.
    x_bf16 = x.astype(jnp.bfloat16)
    out_b = jax.block_until_ready(funact(x_bf16, "softplus"))
    xb_f32 = x_bf16.astype(jnp.float32)
    ref_b = jnp.where(xb_f32 > 20.0, xb_f32, jnp.log1p(jnp.exp(jnp.minimum(xb_f32, 20.0))))
    ok = ok and out_b.dtype == jnp.bfloat16
    ok = ok and bool(jnp.allclose(out_b.astype(jnp.float32), ref_b, atol=2e-2, rtol=2e-2))

    if ok:
        print("KERNEL_OK")
    else:
        print("KERNEL_MISMATCH")
</pallas_src>

<mosaic_0001>
module attributes {stable_mosaic.version = 11 : i64} {
  func.func @_funact_kernel(%arg0: i32, %arg1: memref<16x128xf32, #tpu.memory_space<vmem>>, %arg2: memref<16x128xf32, #tpu.memory_space<vmem>>) attributes {dimension_semantics = [#tpu.dimension_semantics<parallel>], iteration_bounds = array<i64: 1>, scalar_prefetch = 0 : i64, scratch_operands = 0 : i64, tpu.core_type = #tpu.core_type<tc>, window_params = [{transform_indices = @transform_0, window_bounds = array<i64: 16, 128>}, {transform_indices = @transform_1, window_bounds = array<i64: 16, 128>}]} {
    %c0 = arith.constant 0 : index
    %c0_0 = arith.constant 0 : index
    %0 = vector.load %arg1[%c0, %c0_0] : memref<16x128xf32, #tpu.memory_space<vmem>>, vector<16x128xf32>
    %1 = math.sin %0 : vector<16x128xf32>
    %c0_1 = arith.constant 0 : index
    %c0_2 = arith.constant 0 : index
    %2 = vector.load %arg2[%c0_1, %c0_2] : memref<16x128xf32, #tpu.memory_space<vmem>>, vector<16x128xf32>
    tpu.vector_store %arg2[%c0_1, %c0_2], %1 {strides = array<i32>} : memref<16x128xf32, #tpu.memory_space<vmem>>, vector<16x128xf32>,
    return
  }
  func.func @transform_0(%arg0: i32) -> (i32, i32) {
    %c0_i32 = arith.constant 0 : i32
    %c0_i32_0 = arith.constant 0 : i32
    return %arg0, %c0_i32 : i32, i32
  }
  func.func @transform_1(%arg0: i32) -> (i32, i32) {
    %c0_i32 = arith.constant 0 : i32
    %c0_i32_0 = arith.constant 0 : i32
    return %arg0, %c0_i32 : i32, i32
  }
}

</mosaic_0001>

<llo_original>
// kernel: _funact_jit.1
$region0: #{_funact_jit.1}
  #allocation0 [shape = 'u32[]', space=smem, size = 0x4, offset = 0x4, fixed_abs, tag = 'smem constant byte address 0x4 - core index']
  #allocation1 [shape = 'u32[144,128]{1,0:T(1,128)}', space=vmem, size = 0x12000, scoped, tag = 'internal scratch']
  %s0 = inlined_call_operand.vmem [shape: f32[16,128], index: 0, kind: input, shape index: {}]
  %s1 = inlined_call_operand.vmem [shape: f32[16,128], index: 1, kind: output, shape index: {}]
  %s2 = sld [smem:[#allocation0]]
  $region14: #{_funact_jit.1} parent=0
    _
  %s4 = ssub.s32 1, %s2
  %s5 = scalar_select 0, %s4, %s2
  // Predicated region
  $region2: #{_funact_jit.1} parent=0 // pred_check
    _
  $region3: #{_funact_jit.1} parent=0 // pred_check_branch
    %7 = sbr.rel (0) target = $region5
  $region4: #{_funact_jit.1} parent=0 // pred_region
    _
  $region5: #{_funact_jit.1} parent=0 // pred_fallthru
    _
  %v8 = vld [vmem:[%s0] sm:$0xff]
  %v9 = vld [vmem:[%s0 + $0x8] sm:$0xff]
  %v10 = vand.u32 2147483647, %v8
  %vm11 = vcmp.le.f32.partialorder %v10, 0.7853982
  %vm12 = vcmp.lt.s32.totalorder %v8, 0
  %v13 = vand.u32 %v8, 2139095040
  %v14 = vshrl.u32 %v13, 23
  %v15 = vsub.s32 %v14, 127
  %v16 = vand.u32 2147483647, %v8
  %v17 = vand.u32 %v16, 8388607
  %v18 = vor.u32 %v17, 8388608
  %v19 = vsub.s32 0, %v18
  %v20 = vadd.s32 %v15, 1
  %vm21 = vcmp.gt.s32.totalorder %v20, 0
  %v22 = vsel %vm21, %v20, 0
  %v23 = vshrl.u32 %v22, 5
  %v24 = vand.u32 %v22, 31
  %v25 = vsub.s32 32, %v24
  %v26 = vshrl.u32 683565275, %v25
  %v27 = vshll.u32 683565275, %v24
  %v28 = vshrl.u32 2475754826, %v25
  %v29 = vor.u32 %v27, %v28
  %v30 = vshll.u32 2475754826, %v24
  %v31 = vshrl.u32 2131351028, %v25
  %v32 = vor.u32 %v30, %v31
  %v33 = vshll.u32 2131351028, %v24
  %v34 = vshrl.u32 2102212464, %v25
  %v35 = vor.u32 %v33, %v34
  %v36 = vshll.u32 2102212464, %v24
  %v37 = vshrl.u32 920167782, %v25
  %v38 = vor.u32 %v36, %v37
  %v39 = vshll.u32 920167782, %v24
  %v40 = vshrl.u32 1326507024, %v25
  %v41 = vor.u32 %v39, %v40
  %vm42 = vcmp.lt.s32.totalorder %v23, 1
  %vm43 = vcmp.lt.s32.totalorder %v23, 2
  %vm44 = vcmp.lt.s32.totalorder %v23, 3
  %vm45 = vcmp.lt.s32.totalorder %v23, 4
  %v46 = vsel %vm42, %v26, %v29
  %v47 = vsel %vm45, %v35, 2102212464
  %v48 = vsel %vm44, %v32, %v47
  %v49 = vsel %vm43, %v46, %v48
  %v50 = vsel %vm42, %v29, %v32
  %v51 = vsel %vm45, %v38, 920167782
  %v52 = vsel %vm44, %v35, %v51
  %v53 = vsel %vm43, %v50, %v52
  %v54 = vsel %vm42, %v32, %v35
  %v55 = vsel %vm45, %v41, 1326507024
  %v56 = vsel %vm44, %v38, %v55
  %v57 = vsel %vm43, %v54, %v56
  %v58 = vshll.u32 %v18, 8
  %v59 = vmul.u32.u64.compose %v58, %v57
  %v60 = vextract.low.u32 %v59
  %v61 = vextract.high.u32 %v59
  %v62 = vmul.u32.u64.compose %v58, %v53
  %v63 = vextract.low.u32 %v62
  %v64 = vextract.high.u32 %v62
  %v65 = vmul.u32 %v58, %v49
  %v66 = vadd.s32 %v61, %v63
  %vm67 = vc.u32 %v61, %v63
  %v68 = vadd.s32 %v64, 1
  %v69 = vsel %vm67, %v68, %v64
  %v70 = vadd.s32 %v65, %v69
  %v71 = vadd.s32 %v70, 536870912
  %v72 = vshrl.u32 %v71, 30
  %v73 = vshll.u32 %v72, 30
  %v74 = vsub.s32 %v70, %v73
  %vm75 = vcmp.lt.s32.totalorder %v74, 0
  %v76 = vsub.s32 0, %v74
  %v77 = vsel %vm75, %v76, %v74
  %v78 = vclz %v77
  %v79 = vsub.s32 %v78, 2
  %vm80 = vcmp.gt.s32.totalorder 0, %v79
  %v81 = vsel %vm80, 0, %v79
  %v82 = vsub.s32 32, %v81
  %v83 = vshll.u32 %v74, %v81
  %v84 = vshrl.u32 %v66, %v82
  %v85 = vor.u32 %v83, %v84
  %v86 = vsub.s32 4294967266, %v81
  %v87 = vadd.s32 %v86, 127
  %v88 = vshll.u32 %v87, 23
  %v89 = vor.u32 4788187, %v88
  %v90 = vand.u32 2147483647, %v89
  %v92 = vcvt.s32.f32 %v85
  %v93 = vmul.f32 %v92, %v90
  %v94 = vxor.u32 %v93, 2147483648
  %v95 = vsel %vm12, %v94, %v93
  %v96 = vsub.s32 4, %v72
  %v97 = vsel %vm12, %v96, %v72
  %v98 = vsel %vm11, %v8, %v95
  %v99 = vsel %vm11, 0, %v97
  %v100 = vcosq.f32.pop %v98
  %v101 = vsinq.f32.pop %v98
  %vm102 = vweird.f32 %v8
  %v103 = vadd.s32 %v99, 3
  %v104 = vand.u32 %v103, 3
  %vm105 = vcmp.lt.s32.totalorder %v104, 2
  %vm106 = vcmp.eq.s32.totalorder %v104, 0
  %v107 = vxor.u32 %v101, 2147483648
  %v108 = vsel %vm106, %v100, %v107
  %vm109 = vcmp.eq.s32.totalorder %v104, 2
  %v110 = vxor.u32 %v100, 2147483648
  %v111 = vsel %vm109, %v110, %v101
  %v112 = vsel %vm105, %v108, %v111
  %v113 = vsel %vm102, nan, %v112
  %v114 = vand.u32 2147483647, %v9
  %vm115 = vcmp.le.f32.partialorder %v114, 0.7853982
  %vm116 = vcmp.lt.s32.totalorder %v9, 0
  %v117 = vand.u32 %v9, 2139095040
  %v118 = vshrl.u32 %v117, 23
  %v119 = vsub.s32 %v118, 127
  %v120 = vand.u32 2147483647, %v9
  %v121 = vand.u32 %v120, 8388607
  %v122 = vor.u32 %v121, 8388608
  %v123 = vsub.s32 0, %v122
  %v124 = vadd.s32 %v119, 1
  %vm125 = vcmp.gt.s32.totalorder %v124, 0
  %v126 = vsel %vm125, %v124, 0
  %v127 = vshrl.u32 %v126, 5
  %v128 = vand.u32 %v126, 31
  %v129 = vsub.s32 32, %v128
  %v130 = vshrl.u32 683565275, %v129
  %v131 = vshll.u32 683565275, %v128
  %v132 = vshrl.u32 2475754826, %v129
  %v133 = vor.u32 %v131, %v132
  %v134 = vshll.u32 2475754826, %v128
  %v135 = vshrl.u32 2131351028, %v129
  %v136 = vor.u32 %v134, %v135
  %v137 = vshll.u32 2131351028, %v128
  %v138 = vshrl.u32 2102212464, %v129
  %v139 = vor.u32 %v137, %v138
  %v140 = vshll.u32 2102212464, %v128
  %v141 = vshrl.u32 920167782, %v129
  %v142 = vor.u32 %v140, %v141
  %v143 = vshll.u32 920167782, %v128
  %v144 = vshrl.u32 1326507024, %v129
  %v145 = vor.u32 %v143, %v144
  %vm146 = vcmp.lt.s32.totalorder %v127, 1
  %vm147 = vcmp.lt.s32.totalorder %v127, 2
  %vm148 = vcmp.lt.s32.totalorder %v127, 3
  %vm149 = vcmp.lt.s32.totalorder %v127, 4
  %v150 = vsel %vm146, %v130, %v133
  %v151 = vsel %vm149, %v139, 2102212464
  %v152 = vsel %vm148, %v136, %v151
  %v153 = vsel %vm147, %v150, %v152
  %v154 = vsel %vm146, %v133, %v136
  %v155 = vsel %vm149, %v142, 920167782
  %v156 = vsel %vm148, %v139, %v155
  %v157 = vsel %vm147, %v154, %v156
  %v158 = vsel %vm146, %v136, %v139
  %v159 = vsel %vm149, %v145, 1326507024
  %v160 = vsel %vm148, %v142, %v159
  %v161 = vsel %vm147, %v158, %v160
  %v162 = vshll.u32 %v122, 8
  %v163 = vmul.u32.u64.compose %v162, %v161
  %v164 = vextract.low.u32 %v163
  %v165 = vextract.high.u32 %v163
  %v166 = vmul.u32.u64.compose %v162, %v157
  %v167 = vextract.low.u32 %v166
  %v168 = vextract.high.u32 %v166
  %v169 = vmul.u32 %v162, %v153
  %v170 = vadd.s32 %v165, %v167
  %vm171 = vc.u32 %v165, %v167
  %v172 = vadd.s32 %v168, 1
  %v173 = vsel %vm171, %v172, %v168
  %v174 = vadd.s32 %v169, %v173
  %v175 = vadd.s32 %v174, 536870912
  %v176 = vshrl.u32 %v175, 30
  %v177 = vshll.u32 %v176, 30
  %v178 = vsub.s32 %v174, %v177
  %vm179 = vcmp.lt.s32.totalorder %v178, 0
  %v180 = vsub.s32 0, %v178
  %v181 = vsel %vm179, %v180, %v178
  %v182 = vclz %v181
  %v183 = vsub.s32 %v182, 2
  %vm184 = vcmp.gt.s32.totalorder 0, %v183
  %v185 = vsel %vm184, 0, %v183
  %v186 = vsub.s32 32, %v185
  %v187 = vshll.u32 %v178, %v185
  %v188 = vshrl.u32 %v170, %v186
  %v189 = vor.u32 %v187, %v188
  %v190 = vsub.s32 4294967266, %v185
  %v191 = vadd.s32 %v190, 127
  %v192 = vshll.u32 %v191, 23
  %v193 = vor.u32 4788187, %v192
  %v194 = vand.u32 2147483647, %v193
  %v196 = vcvt.s32.f32 %v189
  %v197 = vmul.f32 %v196, %v194
  %v198 = vxor.u32 %v197, 2147483648
  %v199 = vsel %vm116, %v198, %v197
  %v200 = vsub.s32 4, %v176
  %v201 = vsel %vm116, %v200, %v176
  %v202 = vsel %vm115, %v9, %v199
  %v203 = vsel %vm115, 0, %v201
  %v204 = vcosq.f32.pop %v202
  %v205 = vsinq.f32.pop %v202
  %vm206 = vweird.f32 %v9
  %v207 = vadd.s32 %v203, 3
  %v208 = vand.u32 %v207, 3
  %vm209 = vcmp.lt.s32.totalorder %v208, 2
  %vm210 = vcmp.eq.s32.totalorder %v208, 0
  %v211 = vxor.u32 %v205, 2147483648
  %v212 = vsel %vm210, %v204, %v211
  %vm213 = vcmp.eq.s32.totalorder %v208, 2
  %v214 = vxor.u32 %v204, 2147483648
  %v215 = vsel %vm213, %v214, %v205
  %v216 = vsel %vm209, %v212, %v215
  %v217 = vsel %vm206, nan, %v216
  %218 = vst [vmem:[%s1] sm:$0xff] %v113
  %219 = vst [vmem:[%s1 + $0x8] sm:$0xff] %v217
  // Predicated region
  $region6: #{_funact_jit.1} parent=0 // pred_check
    _
  $region7: #{_funact_jit.1} parent=0 // pred_check_branch
    %221 = sbr.rel (0) target = $region9
  $region8: #{_funact_jit.1} parent=0 // pred_region
    _
  $region9: #{_funact_jit.1} parent=0 // pred_fallthru
    _
  // Predicated region
  $region10: #{_funact_jit.1} parent=0 // pred_check
    _
  $region11: #{_funact_jit.1} parent=0 // pred_check_branch
    %223 = sbr.rel (0) target = $region13
  $region12: #{_funact_jit.1} parent=0 // pred_region
    _
  $region13: #{_funact_jit.1} parent=0 // pred_fallthru
    _

</llo_original>
